<compile_context>
chip_gen: v7x
topology: tpu7x:2x2x1
jax: 0.10.0
libtpu: 0.0.40
codegen_flags: <defaults>
</compile_context>

<pallas_src>
import functools
import math

import jax
import jax.numpy as jnp
from jax import lax
from jax.experimental import pallas as pl
from jax.experimental.pallas import tpu as pltpu

_NEG_BIG = -1e10   # Python float: same masking constant as the PyTorch module.


def _proj_kernel(x_ref, w_ref, a_src_ref, a_dst_ref,
                 wh_ref, src_ref, dst_ref, *, n_heads):
    """Per row-tile: Wh_h = x @ W_h (bf16 MXU, f32 acc) plus the rank-1 score vectors
    src[i,h] = Wh_h[i,:]·a[:F]   and   dst[h,i] = Wh_h[i,:]·a[F:]  (stored as a row)."""
    x = x_ref[...].astype(jnp.bfloat16)              # (tm, Din)
    a_src = a_src_ref[...]                           # (1, F) f32
    a_dst = a_dst_ref[...]                           # (1, F) f32

    src_cols = []
    dst_rows = []
    for h in range(n_heads):
        wh = jnp.dot(x, w_ref[h], preferred_element_type=jnp.float32)   # (tm, F) f32
        wh_ref[h] = wh.astype(jnp.bfloat16)
        # src score column (tm, 1)
        src_cols.append(jnp.sum(wh * a_src, axis=-1, keepdims=True))
        # dst score as a ROW (1, tm): avoids any transpose in the attention kernel.
        dst_rows.append(
            lax.dot_general(a_dst, wh, (((1,), (1,)), ((), ())),
                            preferred_element_type=jnp.float32))
    src_ref[...] = jnp.concatenate(src_cols, axis=1)         # (tm, H)
    dst_ref[...] = jnp.concatenate(dst_rows, axis=0)         # (H, tm)


def _attn_kernel(src_ref, dst_ref, wh_ref, adj_ref, out_ref,
                 m_sc, l_sc, acc_sc, *, n_heads, alpha):
    """Flash-style masked softmax + aggregation over neighbor (j) tiles, per head."""
    j = pl.program_id(1)

    @pl.when(j == 0)
    def _():
        m_sc[...] = jnp.full_like(m_sc, -jnp.inf)
        l_sc[...] = jnp.zeros_like(l_sc)
        acc_sc[...] = jnp.zeros_like(acc_sc)

    # Adjacency -> additive bias, computed once per (i, j) tile (hoisted out of the
    # head loop).  adj arrives as int8 0/1.  Python-float branches -> jaxpr literals.
    bias = jnp.where(adj_ref[...] != 0, 0.0, _NEG_BIG).astype(jnp.float32)   # (tm, tn)

    src = src_ref[...]                                                   # (tm, H)
    dst = dst_ref[...]                                                   # (H, tn)

    for h in range(n_heads):
        # e[i,j] = LeakyReLU(src[i,h] + dst[h,j]) masked by adjacency (rank-1 broadcast,
        # no matmul needed).
        e = src[:, h:h + 1] + dst[h:h + 1, :]                            # (tm, tn)
        e = jnp.where(e > 0, e, alpha * e)                               # LeakyReLU
        e = e + bias

        # Online softmax over the neighbor axis (running max / denom / numerator).
        m_prev = m_sc[h]                                                 # (tm, 1)
        m_new = jnp.maximum(m_prev, jnp.max(e, axis=1, keepdims=True))
        scale = jnp.exp(m_prev - m_new)                                  # (tm, 1)
        p = jnp.exp(e - m_new)                                           # (tm, tn) f32
        l_sc[h] = scale * l_sc[h] + jnp.sum(p, axis=1, keepdims=True)
        acc_sc[h] = scale * acc_sc[h] + jnp.dot(
            p.astype(jnp.bfloat16), wh_ref[h],                           # (tn, F) bf16
            preferred_element_type=jnp.float32)
        m_sc[h] = m_new
        # Attention dropout: eval-mode identity.
        # TODO(synk): training-mode dropout via pltpu.prng_seed / prng_random_bits.

    @pl.when(j == pl.num_programs(1) - 1)
    def _():
        # One EUP reciprocal per row per head (instead of N divides), then head mean.
        total = acc_sc[0] * pl.reciprocal(l_sc[0], approx=True)
        for h in range(1, n_heads):
            total = total + acc_sc[h] * pl.reciprocal(l_sc[h], approx=True)
        out_ref[...] = total * (1.0 / n_heads)


def _pick_tile(n, target):
    """Use `target` if it divides n, otherwise fall back to a single full-extent block
    (full-extent blocks are exempt from the (8,128) divisibility rule)."""
    # TODO(synk): pad N to a tile multiple for very large, non-divisible node counts.
    if n >= target and n % target == 0:
        return target
    return n


def gat_adj_forward(x, adj, W, a, *, n_heads, out_features, alpha=0.2,
                    block_rows=128, block_cols=512, block_proj=256):
    N, in_features = x.shape
    H, F = n_heads, out_features
    assert W.shape == (in_features, H * F)
    assert a.shape == (2 * F, 1)

    # Parameter-only reshapes / casts (done once, outside the kernels):
    #  * W -> (H, Din, F): each head's matrix is a leading-axis slice.
    #  * adjacency -> int8 0/1 mask.
    w_heads = W.reshape(in_features, H, F).transpose(1, 0, 2).astype(jnp.bfloat16)
    a_src = a[:F, 0].reshape(1, F).astype(jnp.float32)
    a_dst = a[F:, 0].reshape(1, F).astype(jnp.float32)
    adj_mask = (adj > 0).astype(jnp.int8)

    # ---- Kernel 1: per-head projection + rank-1 attention score vectors.
    tp = _pick_tile(N, block_proj)
    wh, src_s, dst_s = pl.pallas_call(
        functools.partial(_proj_kernel, n_heads=H),
        out_shape=(jax.ShapeDtypeStruct((H, N, F), jnp.bfloat16),
                   jax.ShapeDtypeStruct((N, H), jnp.float32),
                   jax.ShapeDtypeStruct((H, N), jnp.float32)),
        grid_spec=pltpu.PrefetchScalarGridSpec(
            num_scalar_prefetch=0,
            grid=(N // tp,),
            in_specs=[pl.BlockSpec((tp, in_features), lambda i: (i, 0)),
                      pl.BlockSpec((H, in_features, F), lambda i: (0, 0, 0)),
                      pl.BlockSpec((1, F), lambda i: (0, 0)),
                      pl.BlockSpec((1, F), lambda i: (0, 0))],
            out_specs=[pl.BlockSpec((H, tp, F), lambda i: (0, i, 0)),
                       pl.BlockSpec((tp, H), lambda i: (i, 0)),
                       pl.BlockSpec((H, tp), lambda i: (0, i))]),
        compiler_params=pltpu.CompilerParams(dimension_semantics=("parallel",)),
    )(x.astype(jnp.float32), w_heads, a_src, a_dst)

    # ---- Kernel 2: tiled, masked, online-softmax attention + per-head aggregation.
    tm = _pick_tile(N, block_rows)   # query-row tile  (parallel)
    tn = _pick_tile(N, block_cols)   # neighbor tile   (reduction / arbitrary)
    out = pl.pallas_call(
        functools.partial(_attn_kernel, n_heads=H, alpha=alpha),
        out_shape=jax.ShapeDtypeStruct((N, F), jnp.float32),
        grid_spec=pltpu.PrefetchScalarGridSpec(
            num_scalar_prefetch=0,
            grid=(N // tm, N // tn),
            in_specs=[pl.BlockSpec((tm, H), lambda i, j: (i, 0)),
                      pl.BlockSpec((H, tn), lambda i, j: (0, j)),
                      pl.BlockSpec((H, tn, F), lambda i, j: (0, j, 0)),
                      pl.BlockSpec((tm, tn), lambda i, j: (i, j))],
            out_specs=pl.BlockSpec((tm, F), lambda i, j: (i, 0)),
            scratch_shapes=[pltpu.VMEM((H, tm, 1), jnp.float32),    # running max
                            pltpu.VMEM((H, tm, 1), jnp.float32),    # running denom
                            pltpu.VMEM((H, tm, F), jnp.float32)]),  # running numerator
        compiler_params=pltpu.CompilerParams(
            dimension_semantics=("parallel", "arbitrary"),
            vmem_limit_bytes=64 * 1024 * 1024),
    )(src_s, dst_s, wh, adj_mask)
    return out


def gat_adj_reference(x, adj, W, a, *, n_heads, out_features, alpha=0.2):
    """Pure-JAX f32 reference mirroring the PyTorch forward (eval-mode dropout)."""
    N = x.shape[0]
    F = out_features
    Wh = (x @ W).reshape(N, n_heads, F)
    a_src = a[:F, 0]
    a_dst = a[F:, 0]
    e = (jnp.einsum('ihf,f->ih', Wh, a_src)[:, None, :]
         + jnp.einsum('jhf,f->jh', Wh, a_dst)[None, :, :])       # (N, N, H)
    e = jnp.where(e > 0, e, alpha * e)
    e = jnp.where(adj[:, :, None] > 0, e, jnp.float32(-1e10))
    att = jax.nn.softmax(e, axis=1)
    h = jnp.einsum('ijh,jhf->ihf', att, Wh)
    return h.mean(axis=1)


if __name__ == "__main__":
    # Module hyperparameters (small, consistent with the PyTorch __init__).
    num_nodes = 16
    in_features = 32
    out_features = 32
    n_heads = 2
    alpha = 0.2

    key = jax.random.PRNGKey(0)
    k_x, k_adj, k_w, k_a = jax.random.split(key, 4)

    # Node features.
    x = jax.random.normal(k_x, (num_nodes, in_features), dtype=jnp.float32)

    # Random adjacency with self-loops (>0 means connected).
    adj = (jax.random.uniform(k_adj, (num_nodes, num_nodes)) > 0.5).astype(jnp.float32)
    adj = jnp.maximum(adj, jnp.eye(num_nodes, dtype=jnp.float32))

    # Deterministic Xavier-uniform parameter init (same shapes as the nn.Module).
    w_bound = math.sqrt(6.0 / (in_features + n_heads * out_features))
    W = jax.random.uniform(k_w, (in_features, n_heads * out_features),
                           minval=-w_bound, maxval=w_bound, dtype=jnp.float32)
    a_bound = math.sqrt(6.0 / (2 * out_features + 1))
    a = jax.random.uniform(k_a, (2 * out_features, 1),
                           minval=-a_bound, maxval=a_bound, dtype=jnp.float32)

    out = gat_adj_forward(x, adj, W, a, n_heads=n_heads,
                          out_features=out_features, alpha=alpha)
    out = jax.block_until_ready(out)

    ref = gat_adj_reference(x, adj, W, a, n_heads=n_heads,
                            out_features=out_features, alpha=alpha)
    assert out.shape == (num_nodes, out_features)
    # bf16 MXU operands (with f32 accumulation) -> compare against the f32 reference
    # with a bf16-appropriate tolerance.
    assert jnp.allclose(out, ref, atol=3e-2, rtol=3e-2), "mismatch vs JAX reference"

    print("KERNEL_OK")
</pallas_src>

<mosaic_0001>
module attributes {stable_mosaic.version = 11 : i64} {
  func.func @_proj_kernel(%arg0: i32, %arg1: memref<16x32xf32, #tpu.memory_space<vmem>>, %arg2: memref<2x32x32xbf16, #tpu.memory_space<vmem>>, %arg3: memref<1x32xf32, #tpu.memory_space<vmem>>, %arg4: memref<1x32xf32, #tpu.memory_space<vmem>>, %arg5: memref<2x16x32xbf16, #tpu.memory_space<vmem>>, %arg6: memref<16x2xf32, #tpu.memory_space<vmem>>, %arg7: memref<2x16xf32, #tpu.memory_space<vmem>>) attributes {dimension_semantics = [#tpu.dimension_semantics<parallel>], iteration_bounds = array<i64: 1>, scalar_prefetch = 0 : i64, scratch_operands = 0 : i64, tpu.core_type = #tpu.core_type<tc>, window_params = [{transform_indices = @transform_0, window_bounds = array<i64: 16, 32>}, {pipeline_mode = #tpu.pipeline_mode<synchronous>, transform_indices = @transform_1, window_bounds = array<i64: 2, 32, 32>}, {pipeline_mode = #tpu.pipeline_mode<synchronous>, transform_indices = @transform_2, window_bounds = array<i64: 1, 32>}, {pipeline_mode = #tpu.pipeline_mode<synchronous>, transform_indices = @transform_3, window_bounds = array<i64: 1, 32>}, {transform_indices = @transform_4, window_bounds = array<i64: 2, 16, 32>}, {transform_indices = @transform_5, window_bounds = array<i64: 16, 2>}, {transform_indices = @transform_6, window_bounds = array<i64: 2, 16>}]} {
    %c0 = arith.constant 0 : index
    %c0_0 = arith.constant 0 : index
    %0 = vector.load %arg1[%c0, %c0_0] : memref<16x32xf32, #tpu.memory_space<vmem>>, vector<16x32xf32>
    %1 = arith.truncf %0 : vector<16x32xf32> to vector<16x32xbf16>
    %c0_1 = arith.constant 0 : index
    %c0_2 = arith.constant 0 : index
    %2 = vector.load %arg3[%c0_1, %c0_2] : memref<1x32xf32, #tpu.memory_space<vmem>>, vector<1x32xf32>
    %c0_3 = arith.constant 0 : index
    %c0_4 = arith.constant 0 : index
    %3 = vector.load %arg4[%c0_3, %c0_4] : memref<1x32xf32, #tpu.memory_space<vmem>>, vector<1x32xf32>
    %c0_5 = arith.constant 0 : index
    %c0_6 = arith.constant 0 : index
    %c0_7 = arith.constant 0 : index
    %4 = vector.load %arg2[%c0_5, %c0_6, %c0_7] : memref<2x32x32xbf16, #tpu.memory_space<vmem>>, vector<1x32x32xbf16>
    %5 = vector.shape_cast %4 : vector<1x32x32xbf16> to vector<32x32xbf16>
    %cst = arith.constant dense<0.000000e+00> : vector<16x32xf32>
    %6 = tpu.matmul %1, %5, %cst {dimension_numbers = #tpu.dot_dimension_numbers<[1], [0], [0], [1], [0, 0, 1, 1], [], []>} : vector<16x32xbf16>, vector<32x32xbf16>, vector<16x32xf32> -> vector<16x32xf32>
    %7 = arith.truncf %6 : vector<16x32xf32> to vector<16x32xbf16>
    %c0_8 = arith.constant 0 : index
    %c0_9 = arith.constant 0 : index
    %c0_10 = arith.constant 0 : index
    %8 = vector.load %arg5[%c0_8, %c0_9, %c0_10] : memref<2x16x32xbf16, #tpu.memory_space<vmem>>, vector<1x16x32xbf16>
    %9 = vector.shape_cast %8 : vector<1x16x32xbf16> to vector<16x32xbf16>
    %10 = vector.shape_cast %7 : vector<16x32xbf16> to vector<1x16x32xbf16>
    tpu.vector_store %arg5[%c0_8, %c0_9, %c0_10], %10 {strides = array<i32>} : memref<2x16x32xbf16, #tpu.memory_space<vmem>>, vector<1x16x32xbf16>,
    %11 = vector.broadcast %2 : vector<1x32xf32> to vector<16x32xf32>
    %12 = arith.mulf %6, %11 : vector<16x32xf32>
    %cst_11 = arith.constant dense<0.000000e+00> : vector<16xf32>
    %13 = vector.multi_reduction <add>, %12, %cst_11 [1] : vector<16x32xf32> to vector<16xf32>
    %14 = vector.shape_cast %13 : vector<16xf32> to vector<16x1xf32>
    %cst_12 = arith.constant dense<0.000000e+00> : vector<1x16xf32>
    %15 = tpu.matmul %3, %6, %cst_12 {dimension_numbers = #tpu.dot_dimension_numbers<[1], [1], [0], [0], [0, 0, 1, 0], [], []>} : vector<1x32xf32>, vector<16x32xf32>, vector<1x16xf32> -> vector<1x16xf32>
    %c1 = arith.constant 1 : index
    %c0_13 = arith.constant 0 : index
    %c0_14 = arith.constant 0 : index
    %16 = vector.load %arg2[%c1, %c0_13, %c0_14] : memref<2x32x32xbf16, #tpu.memory_space<vmem>>, vector<1x32x32xbf16>
    %17 = vector.shape_cast %16 : vector<1x32x32xbf16> to vector<32x32xbf16>
    %cst_15 = arith.constant dense<0.000000e+00> : vector<16x32xf32>
    %18 = tpu.matmul %1, %17, %cst_15 {dimension_numbers = #tpu.dot_dimension_numbers<[1], [0], [0], [1], [0, 0, 1, 1], [], []>} : vector<16x32xbf16>, vector<32x32xbf16>, vector<16x32xf32> -> vector<16x32xf32>
    %19 = arith.truncf %18 : vector<16x32xf32> to vector<16x32xbf16>
    %c1_16 = arith.constant 1 : index
    %c0_17 = arith.constant 0 : index
    %c0_18 = arith.constant 0 : index
    %20 = vector.load %arg5[%c1_16, %c0_17, %c0_18] : memref<2x16x32xbf16, #tpu.memory_space<vmem>>, vector<1x16x32xbf16>
    %21 = vector.shape_cast %20 : vector<1x16x32xbf16> to vector<16x32xbf16>
    %22 = vector.shape_cast %19 : vector<16x32xbf16> to vector<1x16x32xbf16>
    tpu.vector_store %arg5[%c1_16, %c0_17, %c0_18], %22 {strides = array<i32>} : memref<2x16x32xbf16, #tpu.memory_space<vmem>>, vector<1x16x32xbf16>,
    %23 = vector.broadcast %2 : vector<1x32xf32> to vector<16x32xf32>
    %24 = arith.mulf %18, %23 : vector<16x32xf32>
    %cst_19 = arith.constant dense<0.000000e+00> : vector<16xf32>
    %25 = vector.multi_reduction <add>, %24, %cst_19 [1] : vector<16x32xf32> to vector<16xf32>
    %26 = vector.shape_cast %25 : vector<16xf32> to vector<16x1xf32>
    %cst_20 = arith.constant dense<0.000000e+00> : vector<1x16xf32>
    %27 = tpu.matmul %3, %18, %cst_20 {dimension_numbers = #tpu.dot_dimension_numbers<[1], [1], [0], [0], [0, 0, 1, 0], [], []>} : vector<1x32xf32>, vector<16x32xf32>, vector<1x16xf32> -> vector<1x16xf32>
    %28 = tpu.concatenate %14, %26 in 1 : vector<16x1xf32>, vector<16x1xf32> -> vector<16x2xf32>
    %c0_21 = arith.constant 0 : index
    %c0_22 = arith.constant 0 : index
    %29 = vector.load %arg6[%c0_21, %c0_22] : memref<16x2xf32, #tpu.memory_space<vmem>>, vector<16x2xf32>
    tpu.vector_store %arg6[%c0_21, %c0_22], %28 {strides = array<i32>} : memref<16x2xf32, #tpu.memory_space<vmem>>, vector<16x2xf32>,
    %30 = tpu.concatenate %15, %27 in 0 : vector<1x16xf32>, vector<1x16xf32> -> vector<2x16xf32>
    %c0_23 = arith.constant 0 : index
    %c0_24 = arith.constant 0 : index
    %31 = vector.load %arg7[%c0_23, %c0_24] : memref<2x16xf32, #tpu.memory_space<vmem>>, vector<2x16xf32>
    tpu.vector_store %arg7[%c0_23, %c0_24], %30 {strides = array<i32>} : memref<2x16xf32, #tpu.memory_space<vmem>>, vector<2x16xf32>,
    return
  }
  func.func @transform_0(%arg0: i32) -> (i32, i32) {
    %c0_i32 = arith.constant 0 : i32
    %c0_i32_0 = arith.constant 0 : i32
    return %arg0, %c0_i32 : i32, i32
  }
  func.func @transform_1(%arg0: i32) -> (i32, i32, i32) {
    %c0_i32 = arith.constant 0 : i32
    %c0_i32_0 = arith.constant 0 : i32
    %c0_i32_1 = arith.constant 0 : i32
    %c0_i32_2 = arith.constant 0 : i32
    return %c0_i32, %c0_i32_0, %c0_i32_1 : i32, i32, i32
  }
  func.func @transform_2(%arg0: i32) -> (i32, i32) {
    %c0_i32 = arith.constant 0 : i32
    %c0_i32_0 = arith.constant 0 : i32
    %c0_i32_1 = arith.constant 0 : i32
    return %c0_i32, %c0_i32_0 : i32, i32
  }
  func.func @transform_3(%arg0: i32) -> (i32, i32) {
    %c0_i32 = arith.constant 0 : i32
    %c0_i32_0 = arith.constant 0 : i32
    %c0_i32_1 = arith.constant 0 : i32
    return %c0_i32, %c0_i32_0 : i32, i32
  }
  func.func @transform_4(%arg0: i32) -> (i32, i32, i32) {
    %c0_i32 = arith.constant 0 : i32
    %c0_i32_0 = arith.constant 0 : i32
    %c0_i32_1 = arith.constant 0 : i32
    return %c0_i32, %arg0, %c0_i32_0 : i32, i32, i32
  }
  func.func @transform_5(%arg0: i32) -> (i32, i32) {
    %c0_i32 = arith.constant 0 : i32
    %c0_i32_0 = arith.constant 0 : i32
    return %arg0, %c0_i32 : i32, i32
  }
  func.func @transform_6(%arg0: i32) -> (i32, i32) {
    %c0_i32 = arith.constant 0 : i32
    %c0_i32_0 = arith.constant 0 : i32
    return %c0_i32, %arg0 : i32, i32
  }
}

</mosaic_0001>

<llo_original>
// kernel: tpu_custom_call.1
$region0: #{tpu_custom_call.1}
  #allocation0 [shape = 'u32[]', space=smem, size = 0x4, offset = 0x4, fixed_abs, tag = 'smem constant byte address 0x4 - core index']
  #allocation1 [shape = 'u32[144,128]{1,0:T(1,128)}', space=vmem, size = 0x12000, scoped, tag = 'internal scratch']
  %s0 = inlined_call_operand.hbm [shape: f32[16,32], index: 0, kind: input, shape index: {}]
  %s1 = inlined_call_operand.hbm [shape: bf16[2,32,32], index: 1, kind: input, shape index: {}]
  %s2 = inlined_call_operand.vmem [shape: f32[1,32], index: 2, kind: input, shape index: {}]
  %s3 = inlined_call_operand.vmem [shape: f32[1,32], index: 3, kind: input, shape index: {}]
  %s4 = inlined_call_operand.hbm [shape: bf16[2,16,32], index: 4, kind: output, shape index: {0}]
  %s5 = inlined_call_operand.vmem [shape: f32[16,2], index: 5, kind: output, shape index: {1}]
  %s6 = inlined_call_operand.hbm [shape: f32[2,16], index: 6, kind: output, shape index: {2}]
  %7 = xla_tuple %s4, %s5, %s6
  %s8 = sld [smem:[#allocation0]]
  $region50: #{tpu_custom_call.1} parent=0
    _
  %s10 = ssub.s32 1, %s8
  %s11 = scalar_select 0, %s10, %s8
  $region1: #{tpu_custom_call.1} parent=0
    #allocation2 [shape = 'u8[8192]{0}', space=vmem, size = 0x2000, scoped, tag = 'input window, operand 0, single buffered']
    #allocation3 [shape = 's32[1]{0}', space=sflag, size = 0x4, scoped, tag = 'scoped memory for tpu_custom_call.1']
    #allocation4 [shape = 's32[1]{0}', space=sflag, size = 0x4, scoped, tag = 'scoped memory for tpu_custom_call.1']
    #allocation5 [shape = 'u8[16384]{0}', space=vmem, size = 0x4000, scoped, tag = 'input window, operand 1, single buffered']
    #allocation6 [shape = 's32[1]{0}', space=sflag, size = 0x4, scoped, tag = 'scoped memory for tpu_custom_call.1']
    #allocation7 [shape = 'u8[8192]{0}', space=vmem, size = 0x2000, scoped, tag = 'output window, operand 0, single buffered']
    #allocation8 [shape = 'u8[1024]{0}', space=vmem, size = 0x400, scoped, tag = 'output window, operand 2, single buffered']
    #allocation9 [shape = 's32[1]{0}', space=sflag, size = 0x4, scoped, tag = 'scoped memory for tpu_custom_call.1']
    %12 = vsyncpa [#allocation3], 0
    %13 = vsyncpa [#allocation6], 0
    %14 = vsyncpa [#allocation4], 0
    %15 = vsyncpa [#allocation9], 0
    // Predicated region
    $region2: #{tpu_custom_call.1} parent=1 // pred_check
      _
    $region3: #{tpu_custom_call.1} parent=1 // pred_check_branch
      %17 = sbr.rel (0) target = $region5
    $region4: #{tpu_custom_call.1} parent=1 // pred_region
      %s19 = ssub.s32 256, 256
      %20 = vsyncadd [#allocation3], %s19
      %s21 = sshll.u32 [#allocation2], 4
      %s22 = int_to_ptr.vmem [resolvable:$true] %s21
      %27 = dma.hbm_to_vmem [thread:$0]  %s0, 256, %s22, [#allocation3], 128, 128, 8
    $region5: #{tpu_custom_call.1} parent=1 // pred_fallthru
      _
    // Predicated region
    $region6: #{tpu_custom_call.1} parent=1 // pred_check
      _
    $region7: #{tpu_custom_call.1} parent=1 // pred_check_branch
      %29 = sbr.rel (0) target = $region9
    $region8: #{tpu_custom_call.1} parent=1 // pred_region
      %s31 = ssub.s32 512, 512
      %32 = vsyncadd [#allocation6], %s31
      %s33 = sshll.u32 [#allocation5], 4
      %s34 = int_to_ptr.vmem [resolvable:$true] %s33
      %39 = dma.hbm_to_vmem [thread:$0]  %s1, 512, %s34, [#allocation6], 64, 64, 4
    $region9: #{tpu_custom_call.1} parent=1 // pred_fallthru
      _
    // Predicated region
    $region10: #{tpu_custom_call.1} parent=1 // pred_check
      _
    $region11: #{tpu_custom_call.1} parent=1 // pred_check_branch
      %41 = sbr.rel (0) target = $region13
    $region12: #{tpu_custom_call.1} parent=1 // pred_region
      _
    $region13: #{tpu_custom_call.1} parent=1 // pred_fallthru
      _
    // Predicated region
    $region14: #{tpu_custom_call.1} parent=1 // pred_check
      _
    $region15: #{tpu_custom_call.1} parent=1 // pred_check_branch
      %43 = sbr.rel (0) target = $region17
    $region16: #{tpu_custom_call.1} parent=1 // pred_region
      _
    $region17: #{tpu_custom_call.1} parent=1 // pred_fallthru
      _
    // Predicated region
    $region18: #{tpu_custom_call.1} parent=1 // pred_check
      _
    $region19: #{tpu_custom_call.1} parent=1 // pred_check_branch
      %45 = sbr.rel (0) target = $region21
    $region20: #{tpu_custom_call.1} parent=1 // pred_region
      %46 = dma.done [#allocation3], 256
    $region21: #{tpu_custom_call.1} parent=1 // pred_fallthru
      _
    // Predicated region
    $region22: #{tpu_custom_call.1} parent=1 // pred_check
      _
    $region23: #{tpu_custom_call.1} parent=1 // pred_check_branch
      %48 = sbr.rel (0) target = $region25
    $region24: #{tpu_custom_call.1} parent=1 // pred_region
      %49 = dma.done [#allocation6], 512
    $region25: #{tpu_custom_call.1} parent=1 // pred_fallthru
      _
    %v51 = vld [vmem:[#allocation2] sm:$0xff]
    %v52 = vld [vmem:[#allocation2 + $0x8] sm:$0xff]
    %v53 = vpack.c.bf16 %v52, %v51
    %v54 = vld [vmem:[%s2] sm:$0x1]
    %v55 = vld [vmem:[%s3] sm:$0x1]
    %v56 = vld [vmem:[#allocation5] sm:$0xf]
    %v57 = vld [vmem:[#allocation5 + $0x4] sm:$0xf]
    %v58 = vld [vmem:[#allocation5 + $0x8] sm:$0xf]
    %v59 = vld [vmem:[#allocation5 + $0xc] sm:$0xf]
    %v64 = vunpack.c.l.b16 %v56
    %v65 = vunpack.c.l.b16 %v57
    %v66 = vunpack.c.l.b16 %v58
    %v67 = vunpack.c.l.b16 %v59
    %v68 = vpack.c.b16 %v65, %v64
    %v69 = vpack.c.b16 %v67, %v66
    %vm72 = vcmask 261120
    %v74 = vsel %vm72, %v53, 0
    %76 = vmatprep.subr.bf16.mxu0 0
    %77 = vmatpush1.bf16.msra.mxu0 %v68
    %78 = vmatprep.subr.bf16.mxu0 0
    %79 = vmatpush1.bf16.msra.mxu0 %v69
    %80 = vmatprep.subr.bf16.mxu0 0
    %81 = vmatpush1.bf16.msra.mxu0 0
    %82 = vmatprep.subr.bf16.mxu0 0
    %83 = vmatpush1.bf16.msra.mxu0 0
    %84 = vmatprep.subr.bf16.mxu0 0
    %85 = vmatpush1.bf16.msra.mxu0 0
    %86 = vmatprep.subr.bf16.mxu0 0
    %87 = vmatpush1.bf16.msra.mxu0 0
    %88 = vmatprep.subr.bf16.mxu0 0
    %89 = vmatpush1.bf16.msra.mxu0 0
    %90 = vmatprep.subr.bf16.mxu0 0
    %91 = vmatpush1.bf16.msra.mxu0 0
    %92 = vmatprep.subr.bf16.mxu0 0
    %93 = vmatpush1.bf16.msra.mxu0 0
    %94 = vmatprep.subr.bf16.mxu0 0
    %95 = vmatpush1.bf16.msra.mxu0 0
    %96 = vmatprep.subr.bf16.mxu0 0
    %97 = vmatpush1.bf16.msra.mxu0 0
    %98 = vmatprep.subr.bf16.mxu0 0
    %99 = vmatpush1.bf16.msra.mxu0 0
    %100 = vmatprep.subr.bf16.mxu0 0
    %101 = vmatpush1.bf16.msra.mxu0 0
    %102 = vmatprep.subr.bf16.mxu0 0
    %103 = vmatpush1.bf16.msra.mxu0 0
    %104 = vmatprep.subr.bf16.mxu0 0
    %105 = vmatpush1.bf16.msra.mxu0 0
    %106 = vmatprep.subr.bf16.mxu0 0
    %107 = vmatpush1.bf16.msra.mxu0 0
    %108 = vmatprep.mubr.bf16.mxu0 0
    %109 = vmatmul.mubr.bf16.gmra.mrb[0].mxu0 %v74
    %v110 = vpop.f32.mrb[0].mxu0
    %v111 = vadd.f32 0.0, %v110
    %v112 = vpop.f32.mrb[0].mxu0
    %v113 = vpop.f32.mrb[0].mxu0
    %v114 = vadd.f32 0.0, %v113
    %v115 = vpop.f32.mrb[0].mxu0
    %116 = vdwg.mxu0
    %v117 = vpack.c.bf16 %v114, %v111
    %v119 = vunpack.c.l.b16 %v117
    %v120 = vunpack.c.h.b16 %v117
    %v121 = vpack.c.b16 %v119, %v119
    %v122 = vpack.c.b16 %v120, %v120
    %vm125 = vcmask 257024
    %126 = vst.msk [vmem:[#allocation7] sm:$0xf] %vm125, %v121
    %127 = vst.msk [vmem:[#allocation7 + $0x4] sm:$0xf] %vm125, %v122
    %v129 = vlaneseq
    %v130 = vshrl.u32 %v129, 7
    %v131 = vsub.s32 0, %v130
    %v132 = vrot.slane %v54, %v131
    %v134 = vmul.f32 %v111, %v132
    %v135 = vmul.f32 %v114, %v132
    %v136 = vsel %vm72, %v134, 0.0
    %137 = vadd.xlane.f32.xlu0 %v136
    %v138 = vpop.xlane.xlu0 %137
    %v139 = vsel %vm72, %v135, 0.0
    %140 = vadd.xlane.f32.xlu0 %v139
    %v141 = vpop.xlane.xlu0 %140
    %v143 = vsel %vm72, %v55, 0
    %v146 = vsel %vm72, %v111, 0
    %v149 = vsel %vm72, %v114, 0
    %151 = vmatprep.subr.mxu0 0.0
    %152 = vmatpush1.xpose.msra.mxu0 %v146
    %153 = vmatprep.subr.mxu0 0.0
    %154 = vmatpush1.xpose.msra.mxu0 %v149
    %155 = vmatprep.subr.mxu0 0.0
    %156 = vmatpush1.xpose.msra.mxu0 0.0
    %157 = vmatprep.subr.mxu0 0.0
    %158 = vmatpush1.xpose.msra.mxu0 0.0
    %159 = vmatprep.subr.mxu0 0.0
    %160 = vmatpush1.xpose.msra.mxu0 0.0
    %161 = vmatprep.subr.mxu0 0.0
    %162 = vmatpush1.xpose.msra.mxu0 0.0
    %163 = vmatprep.subr.mxu0 0.0
    %164 = vmatpush1.xpose.msra.mxu0 0.0
    %165 = vmatprep.subr.mxu0 0.0
    %166 = vmatpush1.xpose.msra.mxu0 0.0
    %167 = vmatprep.subr.mxu0 0.0
    %168 = vmatpush1.xpose.msra.mxu0 0.0
    %169 = vmatprep.subr.mxu0 0.0
    %170 = vmatpush1.xpose.msra.mxu0 0.0
    %171 = vmatprep.subr.mxu0 0.0
    %172 = vmatpush1.xpose.msra.mxu0 0.0
    %173 = vmatprep.subr.mxu0 0.0
    %174 = vmatpush1.xpose.msra.mxu0 0.0
    %175 = vmatprep.subr.mxu0 0.0
    %176 = vmatpush1.xpose.msra.mxu0 0.0
    %177 = vmatprep.subr.mxu0 0.0
    %178 = vmatpush1.xpose.msra.mxu0 0.0
    %179 = vmatprep.subr.mxu0 0.0
    %180 = vmatpush1.xpose.msra.mxu0 0.0
    %181 = vmatprep.subr.mxu0 0.0
    %182 = vmatpush1.xpose.msra.mxu0 0.0
    %183 = vmatprep.subr.mxu0 0.0
    %184 = vmatpush1.xpose.msra.mxu0 0.0
    %185 = vmatprep.subr.mxu0 0.0
    %186 = vmatpush1.xpose.msra.mxu0 0.0
    %187 = vmatprep.subr.mxu0 0.0
    %188 = vmatpush1.xpose.msra.mxu0 0.0
    %189 = vmatprep.subr.mxu0 0.0
    %190 = vmatpush1.xpose.msra.mxu0 0.0
    %191 = vmatprep.subr.mxu0 0.0
    %192 = vmatpush1.xpose.msra.mxu0 0.0
    %193 = vmatprep.subr.mxu0 0.0
    %194 = vmatpush1.xpose.msra.mxu0 0.0
    %195 = vmatprep.subr.mxu0 0.0
    %196 = vmatpush1.xpose.msra.mxu0 0.0
    %197 = vmatprep.subr.mxu0 0.0
    %198 = vmatpush1.xpose.msra.mxu0 0.0
    %199 = vmatprep.subr.mxu0 0.0
    %200 = vmatpush1.xpose.msra.mxu0 0.0
    %201 = vmatprep.subr.mxu0 0.0
    %202 = vmatpush1.xpose.msra.mxu0 0.0
    %203 = vmatprep.subr.mxu0 0.0
    %204 = vmatpush1.xpose.msra.mxu0 0.0
    %205 = vmatprep.subr.mxu0 0.0
    %206 = vmatpush1.xpose.msra.mxu0 0.0
    %207 = vmatprep.subr.mxu0 0.0
    %208 = vmatpush1.xpose.msra.mxu0 0.0
    %209 = vmatprep.subr.mxu0 0.0
    %210 = vmatpush1.xpose.msra.mxu0 0.0
    %211 = vmatprep.subr.mxu0 0.0
    %212 = vmatpush1.xpose.msra.mxu0 0.0
    %213 = vmatprep.subr.mxu0 0.0
    %214 = vmatpush1.xpose.msra.mxu0 0.0
    %215 = vmatprep.mubr.f32.mxu0 0.0
    %216 = vmatmul.mubr.f32.gmra.mrb[0].mxu0 %v143
    %v217 = vpop.f32.mrb[0].mxu0
    %v218 = vadd.f32 0.0, %v217
    %v219 = vpop.f32.mrb[0].mxu0
    %220 = vdwg.mxu0
    %s221 = scalar_lea.vmem [#allocation5], 16
    %v222 = vld [vmem:[%s221] sm:$0xf]
    %v223 = vld [vmem:[%s221 + $0x4] sm:$0xf]
    %v224 = vld [vmem:[%s221 + $0x8] sm:$0xf]
    %v225 = vld [vmem:[%s221 + $0xc] sm:$0xf]
    %v230 = vunpack.c.l.b16 %v222
    %v231 = vunpack.c.l.b16 %v223
    %v232 = vunpack.c.l.b16 %v224
    %v233 = vunpack.c.l.b16 %v225
    %v234 = vpack.c.b16 %v231, %v230
    %v235 = vpack.c.b16 %v233, %v232
    %238 = vmatprep.subr.bf16.mxu0 0
    %239 = vmatpush1.bf16.msra.mxu0 %v234
    %240 = vmatprep.subr.bf16.mxu0 0
    %241 = vmatpush1.bf16.msra.mxu0 %v235
    %242 = vmatprep.subr.bf16.mxu0 0
    %243 = vmatpush1.bf16.msra.mxu0 0
    %244 = vmatprep.subr.bf16.mxu0 0
    %245 = vmatpush1.bf16.msra.mxu0 0
    %246 = vmatprep.subr.bf16.mxu0 0
    %247 = vmatpush1.bf16.msra.mxu0 0
    %248 = vmatprep.subr.bf16.mxu0 0
    %249 = vmatpush1.bf16.msra.mxu0 0
    %250 = vmatprep.subr.bf16.mxu0 0
    %251 = vmatpush1.bf16.msra.mxu0 0
    %252 = vmatprep.subr.bf16.mxu0 0
    %253 = vmatpush1.bf16.msra.mxu0 0
    %254 = vmatprep.subr.bf16.mxu0 0
    %255 = vmatpush1.bf16.msra.mxu0 0
    %256 = vmatprep.subr.bf16.mxu0 0
    %257 = vmatpush1.bf16.msra.mxu0 0
    %258 = vmatprep.subr.bf16.mxu0 0
    %259 = vmatpush1.bf16.msra.mxu0 0
    %260 = vmatprep.subr.bf16.mxu0 0
    %261 = vmatpush1.bf16.msra.mxu0 0
    %262 = vmatprep.subr.bf16.mxu0 0
    %263 = vmatpush1.bf16.msra.mxu0 0
    %264 = vmatprep.subr.bf16.mxu0 0
    %265 = vmatpush1.bf16.msra.mxu0 0
    %266 = vmatprep.subr.bf16.mxu0 0
    %267 = vmatpush1.bf16.msra.mxu0 0
    %268 = vmatprep.subr.bf16.mxu0 0
    %269 = vmatpush1.bf16.msra.mxu0 0
    %270 = vmatprep.mubr.bf16.mxu0 0
    %271 = vmatmul.mubr.bf16.gmra.mrb[0].mxu0 %v74
    %v272 = vpop.f32.mrb[0].mxu0
    %v273 = vadd.f32 0.0, %v272
    %v274 = vpop.f32.mrb[0].mxu0
    %v275 = vpop.f32.mrb[0].mxu0
    %v276 = vadd.f32 0.0, %v275
    %v277 = vpop.f32.mrb[0].mxu0
    %278 = vdwg.mxu0
    %v279 = vpack.c.bf16 %v276, %v273
    %v281 = vunpack.c.l.b16 %v279
    %v282 = vunpack.c.h.b16 %v279
    %v283 = vpack.c.b16 %v281, %v281
    %v284 = vpack.c.b16 %v282, %v282
    %s287 = scalar_lea.vmem [#allocation7], 8
    %288 = vst.msk [vmem:[%s287] sm:$0xf] %vm125, %v283
    %289 = vst.msk [vmem:[%s287 + $0x4] sm:$0xf] %vm125, %v284
    %v290 = vmul.f32 %v273, %v132
    %v291 = vmul.f32 %v276, %v132
    %v292 = vsel %vm72, %v290, 0.0
    %293 = vadd.xlane.f32.xlu0 %v292
    %v294 = vpop.xlane.xlu0 %293
    %v295 = vsel %vm72, %v291, 0.0
    %296 = vadd.xlane.f32.xlu0 %v295
    %v297 = vpop.xlane.xlu0 %296
    %v299 = vsel %vm72, %v273, 0
    %v302 = vsel %vm72, %v276, 0
    %304 = vmatprep.subr.mxu0 0.0
    %305 = vmatpush1.xpose.msra.mxu0 %v299
    %306 = vmatprep.subr.mxu0 0.0
    %307 = vmatpush1.xpose.msra.mxu0 %v302
    %308 = vmatprep.subr.mxu0 0.0
    %309 = vmatpush1.xpose.msra.mxu0 0.0
    %310 = vmatprep.subr.mxu0 0.0
    %311 = vmatpush1.xpose.msra.mxu0 0.0
    %312 = vmatprep.subr.mxu0 0.0
    %313 = vmatpush1.xpose.msra.mxu0 0.0
    %314 = vmatprep.subr.mxu0 0.0
    %315 = vmatpush1.xpose.msra.mxu0 0.0
    %316 = vmatprep.subr.mxu0 0.0
    %317 = vmatpush1.xpose.msra.mxu0 0.0
    %318 = vmatprep.subr.mxu0 0.0
    %319 = vmatpush1.xpose.msra.mxu0 0.0
    %320 = vmatprep.subr.mxu0 0.0
    %321 = vmatpush1.xpose.msra.mxu0 0.0
    %322 = vmatprep.subr.mxu0 0.0
    %323 = vmatpush1.xpose.msra.mxu0 0.0
    %324 = vmatprep.subr.mxu0 0.0
    %325 = vmatpush1.xpose.msra.mxu0 0.0
    %326 = vmatprep.subr.mxu0 0.0
    %327 = vmatpush1.xpose.msra.mxu0 0.0
    %328 = vmatprep.subr.mxu0 0.0
    %329 = vmatpush1.xpose.msra.mxu0 0.0
    %330 = vmatprep.subr.mxu0 0.0
    %331 = vmatpush1.xpose.msra.mxu0 0.0
    %332 = vmatprep.subr.mxu0 0.0
    %333 = vmatpush1.xpose.msra.mxu0 0.0
    %334 = vmatprep.subr.mxu0 0.0
    %335 = vmatpush1.xpose.msra.mxu0 0.0
    %336 = vmatprep.subr.mxu0 0.0
    %337 = vmatpush1.xpose.msra.mxu0 0.0
    %338 = vmatprep.subr.mxu0 0.0
    %339 = vmatpush1.xpose.msra.mxu0 0.0
    %340 = vmatprep.subr.mxu0 0.0
    %341 = vmatpush1.xpose.msra.mxu0 0.0
    %342 = vmatprep.subr.mxu0 0.0
    %343 = vmatpush1.xpose.msra.mxu0 0.0
    %344 = vmatprep.subr.mxu0 0.0
    %345 = vmatpush1.xpose.msra.mxu0 0.0
    %346 = vmatprep.subr.mxu0 0.0
    %347 = vmatpush1.xpose.msra.mxu0 0.0
    %348 = vmatprep.subr.mxu0 0.0
    %349 = vmatpush1.xpose.msra.mxu0 0.0
    %350 = vmatprep.subr.mxu0 0.0
    %351 = vmatpush1.xpose.msra.mxu0 0.0
    %352 = vmatprep.subr.mxu0 0.0
    %353 = vmatpush1.xpose.msra.mxu0 0.0
    %354 = vmatprep.subr.mxu0 0.0
    %355 = vmatpush1.xpose.msra.mxu0 0.0
    %356 = vmatprep.subr.mxu0 0.0
    %357 = vmatpush1.xpose.msra.mxu0 0.0
    %358 = vmatprep.subr.mxu0 0.0
    %359 = vmatpush1.xpose.msra.mxu0 0.0
    %360 = vmatprep.subr.mxu0 0.0
    %361 = vmatpush1.xpose.msra.mxu0 0.0
    %362 = vmatprep.subr.mxu0 0.0
    %363 = vmatpush1.xpose.msra.mxu0 0.0
    %364 = vmatprep.subr.mxu0 0.0
    %365 = vmatpush1.xpose.msra.mxu0 0.0
    %366 = vmatprep.subr.mxu0 0.0
    %367 = vmatpush1.xpose.msra.mxu0 0.0
    %368 = vmatprep.mubr.f32.mxu0 0.0
    %369 = vmatmul.mubr.f32.gmra.mrb[0].mxu0 %v143
    %v370 = vpop.f32.mrb[0].mxu0
    %v371 = vadd.f32 0.0, %v370
    %v372 = vpop.f32.mrb[0].mxu0
    %373 = vdwg.mxu0
    %vm374 = vcmask 7168
    %v375 = vsel %vm374, %v138, %v294
    %v376 = vsel %vm374, %v141, %v297
    %vm377 = vcmask 15360
    %378 = vst.msk [vmem:[%s5] sm:$0xff] %vm377, %v375
    %379 = vst.msk [vmem:[%s5 + $0x8] sm:$0xff] %vm377, %v376
    %v381 = vrot.slane %v371, 7
    %vm383 = vcmask 1040384
    %v384 = vsel %vm383, %v218, %v381
    %vm385 = vcmask 123904
    %386 = vst.msk [vmem:[#allocation8] sm:$0x3] %vm385, %v384
    // Predicated region
    $region26: #{tpu_custom_call.1} parent=1 // pred_check
      _
    $region27: #{tpu_custom_call.1} parent=1 // pred_check_branch
      %388 = sbr.rel (0) target = $region29
    $region28: #{tpu_custom_call.1} parent=1 // pred_region
      %s390 = ssub.s32 256, 256
      %391 = vsyncadd [#allocation4], %s390
      %s392 = sshll.u32 [#allocation7], 4
      %s393 = int_to_ptr.vmem [resolvable:$true] %s392
      %398 = dma.vmem_to_hbm [thread:$0]  %s393, 256, %s4, [#allocation4], 64, 64, 4
    $region29: #{tpu_custom_call.1} parent=1 // pred_fallthru
      _
    // Predicated region
    $region30: #{tpu_custom_call.1} parent=1 // pred_check
      _
    $region31: #{tpu_custom_call.1} parent=1 // pred_check_branch
      %400 = sbr.rel (0) target = $region33
    $region32: #{tpu_custom_call.1} parent=1 // pred_region
      _
    $region33: #{tpu_custom_call.1} parent=1 // pred_fallthru
      _
    // Predicated region
    $region34: #{tpu_custom_call.1} parent=1 // pred_check
      _
    $region35: #{tpu_custom_call.1} parent=1 // pred_check_branch
      %402 = sbr.rel (0) target = $region37
    $region36: #{tpu_custom_call.1} parent=1 // pred_region
      %s404 = ssub.s32 32, 32
      %405 = vsyncadd [#allocation9], %s404
      %s407 = sshll.u32 [#allocation8], 4
      %s408 = int_to_ptr.vmem [resolvable:$true] %s407
      %410 = dma.vmem_to_hbm [thread:$0]  %s408, 32, %s6, [#allocation9]
    $region37: #{tpu_custom_call.1} parent=1 // pred_fallthru
      _
    // Predicated region
    $region38: #{tpu_custom_call.1} parent=1 // pred_check
      _
    $region39: #{tpu_custom_call.1} parent=1 // pred_check_branch
      %412 = sbr.rel (0) target = $region41
    $region40: #{tpu_custom_call.1} parent=1 // pred_region
      %413 = dma.done [#allocation4], 256
    $region41: #{tpu_custom_call.1} parent=1 // pred_fallthru
      _
    // Predicated region
    $region42: #{tpu_custom_call.1} parent=1 // pred_check
      _
    $region43: #{tpu_custom_call.1} parent=1 // pred_check_branch
      %415 = sbr.rel (0) target = $region45
    $region44: #{tpu_custom_call.1} parent=1 // pred_region
      _
    $region45: #{tpu_custom_call.1} parent=1 // pred_fallthru
      _
    // Predicated region
    $region46: #{tpu_custom_call.1} parent=1 // pred_check
      _
    $region47: #{tpu_custom_call.1} parent=1 // pred_check_branch
      %417 = sbr.rel (0) target = $region49
    $region48: #{tpu_custom_call.1} parent=1 // pred_region
      %418 = dma.done [#allocation9], 32
    $region49: #{tpu_custom_call.1} parent=1 // pred_fallthru
      _
    %419 = vsyncpa [#allocation3], 1
    %420 = vsyncpa [#allocation6], 1
    %421 = vsyncpa [#allocation4], 1
    %422 = vsyncpa [#allocation9], 1

</llo_original>
